<compile_context>
chip_gen: v6e
topology: v6e:2x2x1
jax: 0.10.0
libtpu: 0.0.40
codegen_flags: <defaults>
</compile_context>

<pallas_src>
import jax
import jax.numpy as jnp
from jax.experimental import pallas as pl
from jax.experimental.pallas import tpu as pltpu

IN_DIM = 200  # fixed by the module definition


def _round_up(x, m):
    return (x + m - 1) // m * m


def _cls_encoder_kernel(x_ref, w1_ref, b1_ref, w2_ref, b2_ref, o_ref, h_ref):
    # Grid: (i over M tiles [parallel], j over O tiles [arbitrary, innermost]).
    # x_ref:  [TM, 200]     w1_ref: [200, H]   b1_ref: [1, H]
    # w2_ref: [H, TO]       b2_ref: [1, TO]
    # o_ref:  [TM, TO]      h_ref:  [TM, H] f32 scratch (persists across j)
    @pl.when(pl.program_id(1) == 0)
    def _():
        h = jnp.dot(x_ref[...], w1_ref[...], preferred_element_type=jnp.float32)
        h_ref[...] = jnp.tanh(h + b1_ref[...])

    out = jnp.dot(
        h_ref[...].astype(w2_ref.dtype),
        w2_ref[...],
        preferred_element_type=jnp.float32,
    )
    o_ref[...] = (out + b2_ref[...]).astype(o_ref.dtype)


def cls_encoder(cls_vecs, w1, b1, w2, b2, *, tm=256, to=2048, weight_dtype=None):
    """cls_vecs: [bsz, 6, 200] -> [bsz, 6, num_hidden_layers*2*hidden_size]."""
    bsz, six, in_dim = cls_vecs.shape
    assert in_dim == IN_DIM
    hidden = w1.shape[1]
    out_dim = w2.shape[1]
    out_dtype = cls_vecs.dtype

    # Optional bf16 weight/activation path for v6e/v7x (f32 accumulation kept).
    if weight_dtype is not None:
        cls_vecs = cls_vecs.astype(weight_dtype)
        w1 = w1.astype(weight_dtype)
        w2 = w2.astype(weight_dtype)
    # Biases are added after the f32 accumulate -> keep them f32.
    b1 = b1.astype(jnp.float32)
    b2 = b2.astype(jnp.float32)

    x2d = cls_vecs.reshape(bsz * six, in_dim)
    m = bsz * six

    # Tile sizes: sublane-aligned M tile, lane-dense (multiple of 128) O tile.
    tm = min(tm, _round_up(m, 8))
    m_pad = _round_up(m, tm)
    to = min(to, _round_up(out_dim, 128))
    o_pad = _round_up(out_dim, to)

    if m_pad != m:
        x2d = jnp.pad(x2d, ((0, m_pad - m), (0, 0)))
    if o_pad != out_dim:
        w2 = jnp.pad(w2, ((0, 0), (0, o_pad - out_dim)))
        b2 = jnp.pad(b2, ((0, 0), (0, o_pad - out_dim)))

    grid_m = m_pad // tm
    grid_o = o_pad // to

    # VMEM budget: double-buffered streamed tiles + resident w1/b1 + h scratch.
    w_item = jnp.dtype(x2d.dtype).itemsize
    o_item = jnp.dtype(out_dtype).itemsize
    tile_bytes = (
        2 * (tm * in_dim * w_item          # x tile
             + in_dim * hidden * w_item    # w1 (resident, budget 2x anyway)
             + hidden * 4                  # b1
             + hidden * to * w_item        # w2 tile
             + to * 4                      # b2 tile
             + tm * to * o_item)           # out tile
        + tm * hidden * 4                  # h scratch
    )
    vmem_limit = min(max(int(tile_bytes * 1.5), 16 << 20), 64 << 20)

    cost = pl.CostEstimate(
        flops=2 * m_pad * in_dim * hidden + 2 * m_pad * hidden * o_pad,
        transcendentals=m_pad * hidden,
        bytes_accessed=int(
            x2d.size * w_item
            + w1.size * w_item
            + b1.size * 4
            + grid_m * (w2.size * w_item + b2.size * 4)
            + m_pad * o_pad * o_item
        ),
    )

    out2d = pl.pallas_call(
        _cls_encoder_kernel,
        out_shape=jax.ShapeDtypeStruct((m_pad, o_pad), out_dtype),
        grid_spec=pltpu.PrefetchScalarGridSpec(
            num_scalar_prefetch=0,
            grid=(grid_m, grid_o),
            in_specs=[
                pl.BlockSpec((tm, in_dim), lambda i, j: (i, 0)),       # x
                pl.BlockSpec((in_dim, hidden), lambda i, j: (0, 0)),   # w1
                pl.BlockSpec((1, hidden), lambda i, j: (0, 0)),        # b1
                pl.BlockSpec((hidden, to), lambda i, j: (0, j)),       # w2
                pl.BlockSpec((1, to), lambda i, j: (0, j)),            # b2
            ],
            out_specs=pl.BlockSpec((tm, to), lambda i, j: (i, j)),
            scratch_shapes=[pltpu.VMEM((tm, hidden), jnp.float32)],
        ),
        compiler_params=pltpu.CompilerParams(
            # M tiles are independent (megacore-shardable); O axis must stay
            # "arbitrary" because the h scratch is filled at j == 0 and reused.
            dimension_semantics=("parallel", "arbitrary"),
            vmem_limit_bytes=vmem_limit,
        ),
        cost_estimate=cost,
    )(x2d, w1, b1, w2, b2)

    return out2d[:m, :out_dim].reshape(bsz, six, out_dim)


def init_params(key, hidden_size, num_hidden_layers, dtype=jnp.float32):
    """Deterministic synthetic parameters (same shapes as the PyTorch module)."""
    out_dim = num_hidden_layers * 2 * hidden_size
    k1, k2, k3, k4 = jax.random.split(key, 4)
    lim1 = 1.0 / jnp.sqrt(IN_DIM)
    lim2 = 1.0 / jnp.sqrt(hidden_size)
    w1 = jax.random.uniform(k1, (IN_DIM, hidden_size), dtype, -lim1, lim1)
    b1 = jax.random.uniform(k2, (1, hidden_size), dtype, -lim1, lim1)
    w2 = jax.random.uniform(k3, (hidden_size, out_dim), dtype, -lim2, lim2)
    b2 = jax.random.uniform(k4, (1, out_dim), dtype, -lim2, lim2)
    return w1, b1, w2, b2


if __name__ == "__main__":
    config = {"hidden_size": 32, "num_hidden_layers": 2}
    bsz = 2

    key = jax.random.PRNGKey(0)
    k_x, k_p = jax.random.split(key)

    cls_vecs = jax.random.normal(k_x, (bsz, 6, IN_DIM), jnp.float32)
    w1, b1, w2, b2 = init_params(
        k_p, config["hidden_size"], config["num_hidden_layers"]
    )

    out = cls_encoder(cls_vecs, w1, b1, w2, b2)
    out = jax.block_until_ready(out)

    # Sanity check against a plain-JAX reference of the same math.
    ref = jnp.tanh(cls_vecs @ w1 + b1[0]) @ w2 + b2[0]
    assert out.shape == (
        bsz, 6, config["num_hidden_layers"] * 2 * config["hidden_size"]
    )
    assert jnp.allclose(out, ref, atol=1e-5, rtol=1e-5)

    print("KERNEL_OK")
</pallas_src>

<mosaic_0001>
module attributes {stable_mosaic.version = 11 : i64} {
  func.func @_cls_encoder_kernel(%arg0: i32, %arg1: i32, %arg2: memref<16x200xf32, #tpu.memory_space<vmem>>, %arg3: memref<200x32xf32, #tpu.memory_space<vmem>>, %arg4: memref<1x32xf32, #tpu.memory_space<vmem>>, %arg5: memref<32x128xf32, #tpu.memory_space<vmem>>, %arg6: memref<1x128xf32, #tpu.memory_space<vmem>>, %arg7: memref<16x128xf32, #tpu.memory_space<vmem>>, %arg8: memref<16x32xf32, #tpu.memory_space<vmem>>) attributes {dimension_semantics = [#tpu.dimension_semantics<parallel>, #tpu.dimension_semantics<arbitrary>], iteration_bounds = array<i64: 1, 1>, scalar_prefetch = 0 : i64, scratch_operands = 1 : i64, tpu.core_type = #tpu.core_type<tc>, window_params = [{transform_indices = @transform_0, window_bounds = array<i64: 16, 200>}, {pipeline_mode = #tpu.pipeline_mode<synchronous>, transform_indices = @transform_1, window_bounds = array<i64: 200, 32>}, {pipeline_mode = #tpu.pipeline_mode<synchronous>, transform_indices = @transform_2, window_bounds = array<i64: 1, 32>}, {transform_indices = @transform_3, window_bounds = array<i64: 32, 128>}, {transform_indices = @transform_4, window_bounds = array<i64: 1, 128>}, {transform_indices = @transform_5, window_bounds = array<i64: 16, 128>}]} {
    %c0_i32 = arith.constant 0 : i32
    %0 = arith.cmpi eq, %arg1, %c0_i32 : i32
    %1 = arith.extui %0 : i1 to i32
    %c0_i32_0 = arith.constant 0 : i32
    %2 = arith.cmpi ne, %1, %c0_i32_0 : i32
    scf.if %2 {
      %c0_8 = arith.constant 0 : index
      %c0_9 = arith.constant 0 : index
      %10 = vector.load %arg2[%c0_8, %c0_9] : memref<16x200xf32, #tpu.memory_space<vmem>>, vector<16x200xf32>
      %c0_10 = arith.constant 0 : index
      %c0_11 = arith.constant 0 : index
      %11 = vector.load %arg3[%c0_10, %c0_11] : memref<200x32xf32, #tpu.memory_space<vmem>>, vector<200x32xf32>
      %cst_12 = arith.constant dense<0.000000e+00> : vector<16x32xf32>
      %12 = tpu.matmul %10, %11, %cst_12 {dimension_numbers = #tpu.dot_dimension_numbers<[1], [0], [0], [1], [0, 0, 1, 1], [], []>} : vector<16x200xf32>, vector<200x32xf32>, vector<16x32xf32> -> vector<16x32xf32>
      %c0_13 = arith.constant 0 : index
      %c0_14 = arith.constant 0 : index
      %13 = vector.load %arg4[%c0_13, %c0_14] : memref<1x32xf32, #tpu.memory_space<vmem>>, vector<1x32xf32>
      %14 = vector.broadcast %13 : vector<1x32xf32> to vector<16x32xf32>
      %15 = arith.addf %12, %14 : vector<16x32xf32>
      %16 = math.tanh %15 : vector<16x32xf32>
      %c0_15 = arith.constant 0 : index
      %c0_16 = arith.constant 0 : index
      %17 = vector.load %arg8[%c0_15, %c0_16] : memref<16x32xf32, #tpu.memory_space<vmem>>, vector<16x32xf32>
      tpu.vector_store %arg8[%c0_15, %c0_16], %16 {strides = array<i32>} : memref<16x32xf32, #tpu.memory_space<vmem>>, vector<16x32xf32>,
    } else {
    }
    %c0 = arith.constant 0 : index
    %c0_1 = arith.constant 0 : index
    %3 = vector.load %arg8[%c0, %c0_1] : memref<16x32xf32, #tpu.memory_space<vmem>>, vector<16x32xf32>
    %c0_2 = arith.constant 0 : index
    %c0_3 = arith.constant 0 : index
    %4 = vector.load %arg5[%c0_2, %c0_3] : memref<32x128xf32, #tpu.memory_space<vmem>>, vector<32x128xf32>
    %cst = arith.constant dense<0.000000e+00> : vector<16x128xf32>
    %5 = tpu.matmul %3, %4, %cst {dimension_numbers = #tpu.dot_dimension_numbers<[1], [0], [0], [1], [0, 0, 1, 1], [], []>} : vector<16x32xf32>, vector<32x128xf32>, vector<16x128xf32> -> vector<16x128xf32>
    %c0_4 = arith.constant 0 : index
    %c0_5 = arith.constant 0 : index
    %6 = vector.load %arg6[%c0_4, %c0_5] : memref<1x128xf32, #tpu.memory_space<vmem>>, vector<1x128xf32>
    %7 = vector.broadcast %6 : vector<1x128xf32> to vector<16x128xf32>
    %8 = arith.addf %5, %7 : vector<16x128xf32>
    %c0_6 = arith.constant 0 : index
    %c0_7 = arith.constant 0 : index
    %9 = vector.load %arg7[%c0_6, %c0_7] : memref<16x128xf32, #tpu.memory_space<vmem>>, vector<16x128xf32>
    tpu.vector_store %arg7[%c0_6, %c0_7], %8 {strides = array<i32>} : memref<16x128xf32, #tpu.memory_space<vmem>>, vector<16x128xf32>,
    return
  }
  func.func @transform_0(%arg0: i32, %arg1: i32) -> (i32, i32) {
    %c0_i32 = arith.constant 0 : i32
    %c0_i32_0 = arith.constant 0 : i32
    return %arg0, %c0_i32 : i32, i32
  }
  func.func @transform_1(%arg0: i32, %arg1: i32) -> (i32, i32) {
    %c0_i32 = arith.constant 0 : i32
    %c0_i32_0 = arith.constant 0 : i32
    %c0_i32_1 = arith.constant 0 : i32
    return %c0_i32, %c0_i32_0 : i32, i32
  }
  func.func @transform_2(%arg0: i32, %arg1: i32) -> (i32, i32) {
    %c0_i32 = arith.constant 0 : i32
    %c0_i32_0 = arith.constant 0 : i32
    %c0_i32_1 = arith.constant 0 : i32
    return %c0_i32, %c0_i32_0 : i32, i32
  }
  func.func @transform_3(%arg0: i32, %arg1: i32) -> (i32, i32) {
    %c0_i32 = arith.constant 0 : i32
    %c0_i32_0 = arith.constant 0 : i32
    return %c0_i32, %arg1 : i32, i32
  }
  func.func @transform_4(%arg0: i32, %arg1: i32) -> (i32, i32) {
    %c0_i32 = arith.constant 0 : i32
    %c0_i32_0 = arith.constant 0 : i32
    return %c0_i32, %arg1 : i32, i32
  }
  func.func @transform_5(%arg0: i32, %arg1: i32) -> (i32, i32) {
    %c0_i32 = arith.constant 0 : i32
    return %arg0, %arg1 : i32, i32
  }
}

</mosaic_0001>

<llo_original>
// kernel: tpu_custom_call.1
$region0: #{tpu_custom_call.1}
  #allocation0 [shape = 'u32[]', space=smem, size = 0x4, offset = 0x4, fixed_abs, tag = 'smem constant byte address 0x4 - core index']
  #allocation1 [shape = 'u32[144,128]{1,0:T(1,128)}', space=vmem, size = 0x12000, scoped, tag = 'internal scratch']
  #allocation2 [shape = 'f32[16,32]{1,0:T(8,128)}', space=vmem, size = 0x2000, scoped, tag = 'scratch operand']
  %s0 = inlined_call_operand.vmem [shape: f32[16,200], index: 0, kind: input, shape index: {}]
  %s1 = inlined_call_operand.vmem [shape: f32[200,32], index: 1, kind: input, shape index: {}]
  %s2 = inlined_call_operand.vmem [shape: f32[1,32], index: 2, kind: input, shape index: {}]
  %s3 = inlined_call_operand.vmem [shape: f32[32,128], index: 3, kind: input, shape index: {}]
  %s4 = inlined_call_operand.vmem [shape: f32[1,128], index: 4, kind: input, shape index: {}]
  %s5 = inlined_call_operand.hbm [shape: f32[16,128], index: 5, kind: output, shape index: {}]
  %s6 = sld [smem:[#allocation0]]
  $region34: #{tpu_custom_call.1} parent=0
    _
  %s8 = ssub.s32 1, %s6
  %s9 = scalar_select 0, %s8, %s6
  $region1: #{tpu_custom_call.1} parent=0
    #allocation3 [shape = 'u8[8192]{0}', space=vmem, size = 0x2000, scoped, tag = 'output window, operand 0, single buffered']
    #allocation4 [shape = 's32[1]{0}', space=sflag, size = 0x4, scoped, tag = 'scoped memory for tpu_custom_call.1']
    %10 = vsyncpa [#allocation4], 0
    // Predicated region
    $region2: #{tpu_custom_call.1} parent=1 // pred_check
      _
    $region3: #{tpu_custom_call.1} parent=1 // pred_check_branch
      %12 = sbr.rel (0) target = $region5
    $region4: #{tpu_custom_call.1} parent=1 // pred_region
      _
    $region5: #{tpu_custom_call.1} parent=1 // pred_fallthru
      _
    // Predicated region
    $region6: #{tpu_custom_call.1} parent=1 // pred_check
      _
    $region7: #{tpu_custom_call.1} parent=1 // pred_check_branch
      %14 = sbr.rel (0) target = $region9
    $region8: #{tpu_custom_call.1} parent=1 // pred_region
      _
    $region9: #{tpu_custom_call.1} parent=1 // pred_fallthru
      _
    // Predicated region
    $region10: #{tpu_custom_call.1} parent=1 // pred_check
      _
    $region11: #{tpu_custom_call.1} parent=1 // pred_check_branch
      %16 = sbr.rel (0) target = $region13
    $region12: #{tpu_custom_call.1} parent=1 // pred_region
      _
    $region13: #{tpu_custom_call.1} parent=1 // pred_fallthru
      _
    // Predicated region
    $region14: #{tpu_custom_call.1} parent=1 // pred_check
      _
    $region15: #{tpu_custom_call.1} parent=1 // pred_check_branch
      %18 = sbr.rel (0) target = $region17
    $region16: #{tpu_custom_call.1} parent=1 // pred_region
      _
    $region17: #{tpu_custom_call.1} parent=1 // pred_fallthru
      _
    // Predicated region
    $region18: #{tpu_custom_call.1} parent=1 // pred_check
      _
    $region19: #{tpu_custom_call.1} parent=1 // pred_check_branch
      %20 = sbr.rel (0) target = $region21
    $region20: #{tpu_custom_call.1} parent=1 // pred_region
      _
    $region21: #{tpu_custom_call.1} parent=1 // pred_fallthru
      _
    %p21 = scmp.eq.s32.totalorder 0, 0
    // Predicated region
    $region22: #{tpu_custom_call.1} parent=1 // pred_check
      %p22 = pneg %p21
    $region23: #{tpu_custom_call.1} parent=1 // pred_check_branch
      %24 = sbr.rel (%p22) target = $region25
    $region24: #{tpu_custom_call.1} parent=1 // pred_region
      %v25 = vld [vmem:[%s0] sm:$0xff]
      %v26 = vld [vmem:[%s0 + $0x8] sm:$0xff]
      %v27 = vld [vmem:[%s0 + $0x10] sm:$0xff]
      %v28 = vld [vmem:[%s0 + $0x18] sm:$0xff]
      %v29 = vld [vmem:[%s1] sm:$0xff]
      %v30 = vld [vmem:[%s1 + $0x8] sm:$0xff]
      %v31 = vld [vmem:[%s1 + $0x10] sm:$0xff]
      %v32 = vld [vmem:[%s1 + $0x18] sm:$0xff]
      %v33 = vld [vmem:[%s1 + $0x20] sm:$0xff]
      %v34 = vld [vmem:[%s1 + $0x28] sm:$0xff]
      %v35 = vld [vmem:[%s1 + $0x30] sm:$0xff]
      %v36 = vld [vmem:[%s1 + $0x38] sm:$0xff]
      %v37 = vld [vmem:[%s1 + $0x40] sm:$0xff]
      %v38 = vld [vmem:[%s1 + $0x48] sm:$0xff]
      %v39 = vld [vmem:[%s1 + $0x50] sm:$0xff]
      %v40 = vld [vmem:[%s1 + $0x58] sm:$0xff]
      %v41 = vld [vmem:[%s1 + $0x60] sm:$0xff]
      %v42 = vld [vmem:[%s1 + $0x68] sm:$0xff]
      %v43 = vld [vmem:[%s1 + $0x70] sm:$0xff]
      %v44 = vld [vmem:[%s1 + $0x78] sm:$0xff]
      %v45 = vld [vmem:[%s1 + $0x80] sm:$0xff]
      %v46 = vld [vmem:[%s1 + $0x88] sm:$0xff]
      %v47 = vld [vmem:[%s1 + $0x90] sm:$0xff]
      %v48 = vld [vmem:[%s1 + $0x98] sm:$0xff]
      %v49 = vld [vmem:[%s1 + $0xa0] sm:$0xff]
      %v50 = vld [vmem:[%s1 + $0xa8] sm:$0xff]
      %v51 = vld [vmem:[%s1 + $0xb0] sm:$0xff]
      %v52 = vld [vmem:[%s1 + $0xb8] sm:$0xff]
      %v53 = vld [vmem:[%s1 + $0xc0] sm:$0xff]
      %v54 = vld [vmem:[%s2] sm:$0x1]
      %v56 = vlaneseq
      %v57 = vshrl.u32 %v56, 7
      %v58 = vsub.s32 0, %v57
      %v59 = vrot.slane %v54, %v58
      %vm61 = vcmask 588800
      %v63 = vsel %vm61, %v26, 0
      %v66 = vsel %vm61, %v28, 0
      %68 = vmatprep.subr.mxu0 0.0
      %69 = vmatpush1.msra.mxu0 %v44
      %70 = vmatprep.subr.mxu0 0.0
      %71 = vmatpush1.msra.mxu0 %v43
      %72 = vmatprep.subr.mxu0 0.0
      %73 = vmatpush1.msra.mxu0 %v42
      %74 = vmatprep.subr.mxu0 0.0
      %75 = vmatpush1.msra.mxu0 %v41
      %76 = vmatprep.subr.mxu0 0.0
      %77 = vmatpush1.msra.mxu0 %v40
      %78 = vmatprep.subr.mxu0 0.0
      %79 = vmatpush1.msra.mxu0 %v39
      %80 = vmatprep.subr.mxu0 0.0
      %81 = vmatpush1.msra.mxu0 %v38
      %82 = vmatprep.subr.mxu0 0.0
      %83 = vmatpush1.msra.mxu0 %v37
      %84 = vmatprep.subr.mxu0 0.0
      %85 = vmatpush1.msra.mxu0 %v36
      %86 = vmatprep.subr.mxu0 0.0
      %87 = vmatpush1.msra.mxu0 %v35
      %88 = vmatprep.subr.mxu0 0.0
      %89 = vmatpush1.msra.mxu0 %v34
      %90 = vmatprep.subr.mxu0 0.0
      %91 = vmatpush1.msra.mxu0 %v33
      %92 = vmatprep.subr.mxu0 0.0
      %93 = vmatpush1.msra.mxu0 %v32
      %94 = vmatprep.subr.mxu0 0.0
      %95 = vmatpush1.msra.mxu0 %v31
      %96 = vmatprep.subr.mxu0 0.0
      %97 = vmatpush1.msra.mxu0 %v30
      %98 = vmatprep.subr.mxu0 0.0
      %99 = vmatpush1.msra.mxu0 %v29
      %100 = vmatprep.subr.mxu0 0.0
      %101 = vmatpush2.msra.mxu0 0.0
      %102 = vmatprep.subr.mxu0 0.0
      %103 = vmatpush2.msra.mxu0 0.0
      %104 = vmatprep.subr.mxu0 0.0
      %105 = vmatpush2.msra.mxu0 0.0
      %106 = vmatprep.subr.mxu0 0.0
      %107 = vmatpush2.msra.mxu0 0.0
      %108 = vmatprep.subr.mxu0 0.0
      %109 = vmatpush2.msra.mxu0 0.0
      %110 = vmatprep.subr.mxu0 0.0
      %111 = vmatpush2.msra.mxu0 0.0
      %112 = vmatprep.subr.mxu0 0.0
      %113 = vmatpush2.msra.mxu0 0.0
      %114 = vmatprep.subr.mxu0 0.0
      %115 = vmatpush2.msra.mxu0 %v53
      %116 = vmatprep.subr.mxu0 0.0
      %117 = vmatpush2.msra.mxu0 %v52
      %118 = vmatprep.subr.mxu0 0.0
      %119 = vmatpush2.msra.mxu0 %v51
      %120 = vmatprep.subr.mxu0 0.0
      %121 = vmatpush2.msra.mxu0 %v50
      %122 = vmatprep.subr.mxu0 0.0
      %123 = vmatpush2.msra.mxu0 %v49
      %124 = vmatprep.subr.mxu0 0.0
      %125 = vmatpush2.msra.mxu0 %v48
      %126 = vmatprep.subr.mxu0 0.0
      %127 = vmatpush2.msra.mxu0 %v47
      %128 = vmatprep.subr.mxu0 0.0
      %129 = vmatpush2.msra.mxu0 %v46
      %130 = vmatprep.subr.mxu0 0.0
      %131 = vmatpush2.msra.mxu0 %v45
      %132 = vmatprep.mubr.f32.mxu0 %v63
      %133 = vmatmul.mubr.f32.gmra.mxu0 %v25
      %v134 = vpop.f32.mrf.mxu0
      %v135 = vadd.f32 %v59, %v134
      %v136 = vpop.f32.mrf.mxu0
      %137 = vmatprep.mubr.f32.mxu0 %v66
      %138 = vmatmul.mubr.f32.gmra.mxu0 %v27
      %v139 = vpop.f32.mrf.mxu0
      %v140 = vadd.f32 %v59, %v139
      %v141 = vpop.f32.mrf.mxu0
      %142 = vdwg.mxu0
      %v143 = vtanh.pop %v135
      %v144 = vtanh.pop %v140
      %vm145 = vcmask 261120
      %146 = vst.msk [vmem:[#allocation2] sm:$0xff] %vm145, %v143
      %147 = vst.msk [vmem:[#allocation2 + $0x8] sm:$0xff] %vm145, %v144
    $region25: #{tpu_custom_call.1} parent=1 // pred_fallthru
      _
    %v148 = vld [vmem:[#allocation2] sm:$0xff]
    %v149 = vld [vmem:[#allocation2 + $0x8] sm:$0xff]
    %v150 = vld [vmem:[%s3] sm:$0xff]
    %v151 = vld [vmem:[%s3 + $0x8] sm:$0xff]
    %v152 = vld [vmem:[%s3 + $0x10] sm:$0xff]
    %v153 = vld [vmem:[%s3 + $0x18] sm:$0xff]
    %v154 = vld [vmem:[%s4] sm:$0x1]
    %v156 = vlaneseq
    %v157 = vshrl.u32 %v156, 7
    %v158 = vsub.s32 0, %v157
    %v159 = vrot.slane %v154, %v158
    %vm161 = vcmask 261120
    %v163 = vsel %vm161, %v148, 0
    %v166 = vsel %vm161, %v149, 0
    %168 = vmatprep.subr.mxu0 0.0
    %169 = vmatpush1.msra.mxu0 0.0
    %170 = vmatprep.subr.mxu0 0.0
    %171 = vmatpush1.msra.mxu0 0.0
    %172 = vmatprep.subr.mxu0 0.0
    %173 = vmatpush1.msra.mxu0 0.0
    %174 = vmatprep.subr.mxu0 0.0
    %175 = vmatpush1.msra.mxu0 0.0
    %176 = vmatprep.subr.mxu0 0.0
    %177 = vmatpush1.msra.mxu0 0.0
    %178 = vmatprep.subr.mxu0 0.0
    %179 = vmatpush1.msra.mxu0 0.0
    %180 = vmatprep.subr.mxu0 0.0
    %181 = vmatpush1.msra.mxu0 0.0
    %182 = vmatprep.subr.mxu0 0.0
    %183 = vmatpush1.msra.mxu0 0.0
    %184 = vmatprep.subr.mxu0 0.0
    %185 = vmatpush1.msra.mxu0 0.0
    %186 = vmatprep.subr.mxu0 0.0
    %187 = vmatpush1.msra.mxu0 0.0
    %188 = vmatprep.subr.mxu0 0.0
    %189 = vmatpush1.msra.mxu0 0.0
    %190 = vmatprep.subr.mxu0 0.0
    %191 = vmatpush1.msra.mxu0 0.0
    %192 = vmatprep.subr.mxu0 0.0
    %193 = vmatpush1.msra.mxu0 %v153
    %194 = vmatprep.subr.mxu0 0.0
    %195 = vmatpush1.msra.mxu0 %v152
    %196 = vmatprep.subr.mxu0 0.0
    %197 = vmatpush1.msra.mxu0 %v151
    %198 = vmatprep.subr.mxu0 0.0
    %199 = vmatpush1.msra.mxu0 %v150
    %200 = vmatprep.subr.mxu0 0.0
    %201 = vmatpush2.msra.mxu0 0.0
    %202 = vmatprep.subr.mxu0 0.0
    %203 = vmatpush2.msra.mxu0 0.0
    %204 = vmatprep.subr.mxu0 0.0
    %205 = vmatpush2.msra.mxu0 0.0
    %206 = vmatprep.subr.mxu0 0.0
    %207 = vmatpush2.msra.mxu0 0.0
    %208 = vmatprep.subr.mxu0 0.0
    %209 = vmatpush2.msra.mxu0 0.0
    %210 = vmatprep.subr.mxu0 0.0
    %211 = vmatpush2.msra.mxu0 0.0
    %212 = vmatprep.subr.mxu0 0.0
    %213 = vmatpush2.msra.mxu0 0.0
    %214 = vmatprep.subr.mxu0 0.0
    %215 = vmatpush2.msra.mxu0 0.0
    %216 = vmatprep.subr.mxu0 0.0
    %217 = vmatpush2.msra.mxu0 0.0
    %218 = vmatprep.subr.mxu0 0.0
    %219 = vmatpush2.msra.mxu0 0.0
    %220 = vmatprep.subr.mxu0 0.0
    %221 = vmatpush2.msra.mxu0 0.0
    %222 = vmatprep.subr.mxu0 0.0
    %223 = vmatpush2.msra.mxu0 0.0
    %224 = vmatprep.subr.mxu0 0.0
    %225 = vmatpush2.msra.mxu0 0.0
    %226 = vmatprep.subr.mxu0 0.0
    %227 = vmatpush2.msra.mxu0 0.0
    %228 = vmatprep.subr.mxu0 0.0
    %229 = vmatpush2.msra.mxu0 0.0
    %230 = vmatprep.subr.mxu0 0.0
    %231 = vmatpush2.msra.mxu0 0.0
    %232 = vmatprep.mubr.f32.mxu0 0.0
    %233 = vmatmul.mubr.f32.gmra.mxu0 %v163
    %v234 = vpop.f32.mrf.mxu0
    %v235 = vadd.f32 %v159, %v234
    %v236 = vpop.f32.mrf.mxu0
    %237 = vmatprep.mubr.f32.mxu0 0.0
    %238 = vmatmul.mubr.f32.gmra.mxu0 %v166
    %v239 = vpop.f32.mrf.mxu0
    %v240 = vadd.f32 %v159, %v239
    %v241 = vpop.f32.mrf.mxu0
    %242 = vdwg.mxu0
    %243 = vst [vmem:[#allocation3] sm:$0xff] %v235
    %244 = vst [vmem:[#allocation3 + $0x8] sm:$0xff] %v240
    // Predicated region
    $region26: #{tpu_custom_call.1} parent=1 // pred_check
      _
    $region27: #{tpu_custom_call.1} parent=1 // pred_check_branch
      %246 = sbr.rel (0) target = $region29
    $region28: #{tpu_custom_call.1} parent=1 // pred_region
      %s248 = ssub.s32 256, 256
      %249 = vsyncadd [#allocation4], %s248
      %s250 = sshll.u32 [#allocation3], 4
      %s251 = int_to_ptr.vmem [resolvable:$true] %s250
      %256 = dma.vmem_to_hbm [thread:$0]  %s251, 256, %s5, [#allocation4], 128, 128, 8
    $region29: #{tpu_custom_call.1} parent=1 // pred_fallthru
      _
    // Predicated region
    $region30: #{tpu_custom_call.1} parent=1 // pred_check
      _
    $region31: #{tpu_custom_call.1} parent=1 // pred_check_branch
      %258 = sbr.rel (0) target = $region33
    $region32: #{tpu_custom_call.1} parent=1 // pred_region
      %259 = dma.done [#allocation4], 256
    $region33: #{tpu_custom_call.1} parent=1 // pred_fallthru
      _
    %260 = vsyncpa [#allocation4], 1

</llo_original>
